<compile_context>
chip_gen: v6e
topology: v6e:2x2x1
jax: 0.10.0
libtpu: 0.0.40
codegen_flags: <defaults>
</compile_context>

<pallas_src>
import functools

import jax
import jax.numpy as jnp
from jax.experimental import pallas as pl
from jax.experimental.pallas import tpu as pltpu


def _round_up(x, m):
    return ((x + m - 1) // m) * m


def _cdiv(a, b):
    return -(-a // b)


def _sage_kernel(adj_ref, x_src_ref, x_dst_ref, w_cat_ref, b_ref, o_ref,
                 acc_ref, *, src_resident, deg_col):
    """Grid = (i: dst tiles [parallel], k: src tiles [arbitrary reduction]).

    adj_ref   : (tm, tk)                   bf16 raw 0/1 adjacency tile
    x_src_ref : (tk, Fin_p) or (Ns_p, Fin_p) bf16 (streamed vs VMEM-resident)
    x_dst_ref : (tm, Fin_p)                bf16
    w_cat_ref : (2*Fin_p, Fout_p)          bf16 [W_self ; W_neigh] stacked on K
    b_ref     : (1, Fout_p)                f32
    o_ref     : (tm, Fout_p)               f32
    acc_ref   : (tm, 2*Fin_p) f32 scratch = [x_dst | sum_k adj @ x_src].
                Column `deg_col` accumulates the row degree (ones-column trick).
    """
    k = pl.program_id(1)
    fin = acc_ref.shape[-1] // 2          # padded Fin (static)
    tm, tk = adj_ref.shape

    @pl.when(k == 0)
    def _init():
        acc_ref[:, :fin] = x_dst_ref[...].astype(jnp.float32)
        acc_ref[:, fin:] = jnp.zeros((tm, fin), jnp.float32)

    adj = adj_ref[...]
    if src_resident:
        ks = pl.multiple_of(k * tk, 128)
        xs = x_src_ref[pl.ds(ks, tk), :]
    else:
        xs = x_src_ref[...]

    # Mean-aggregation numerator (and the row degree, via the ones column of
    # x_src), accumulated in f32 on the MXU.
    acc_ref[:, fin:] = acc_ref[:, fin:] + jnp.dot(
        adj, xs, preferred_element_type=jnp.float32
    )

    @pl.when(k == pl.num_programs(1) - 1)
    def _finalize():
        deg = acc_ref[:, deg_col:deg_col + 1]            # (tm, 1) exact integer degree
        inv_deg = jnp.where(deg > 0.0, 1.0 / deg, 0.0)   # f32; deg==0 -> 0
        acc_ref[:, fin:] = acc_ref[:, fin:] * inv_deg    # h_neigh = mean
        # Fused projection: [x_dst | h_neigh] @ [[W_self],[W_neigh]] + b, ReLU.
        rst = jnp.dot(acc_ref[...].astype(jnp.bfloat16), w_cat_ref[...],
                      preferred_element_type=jnp.float32) + b_ref[...]
        o_ref[...] = jnp.maximum(rst, 0.0)


def sage_conv_mean(adj, x_src, x_dst, w_self, w_neigh, bias, *,
                   tm_max=512, tk_max=2048):
    """One SAGEConv('mean') layer with ReLU as a tiled Pallas kernel.

    adj:     [Nd, Ns] binary adjacency (dst x src)
    x_src:   [Ns, Fin]
    x_dst:   [Nd, Fin]
    w_self:  [Fin, Fout]  (already transposed: y = x @ w)
    w_neigh: [Fin, Fout]
    bias:    [1, Fout]
    returns: [Nd, Fout] float32
    """
    n_dst, n_src = adj.shape
    f_in = x_src.shape[1]
    f_out = w_self.shape[1]

    # Lane-dense feature padding + one guaranteed spare column in x_src that is
    # set to 1.0 so the aggregation matmul also yields the row degree for free.
    f_in_p = _round_up(f_in + 1, 128)
    f_out_p = _round_up(f_out, 128)

    # ---- tile selection (pick from the tile COUNT -> bounded padding waste) ----
    # dst (i) axis: force >= 2 i-tiles when there is enough work so both v7x
    # TensorCores get a share of the "parallel" axis.
    n_i = _cdiv(n_dst, tm_max)
    if n_i < 2 and n_dst >= 256:
        n_i = 2
    n_i = max(n_i, 1)
    tm = _round_up(_cdiv(n_dst, n_i), 8)
    n_dst_p = tm * n_i

    # src (k) reduction axis.
    n_k = max(_cdiv(n_src, tk_max), 1)
    tk = _round_up(_cdiv(n_src, n_k), 128)
    n_src_p = tk * n_k

    # Keep x_src fully VMEM-resident when small (conservative budget so the
    # double-buffered total still fits v7x's 64 MiB VMEM under a 48 MiB limit).
    src_resident = (n_k > 1) and (n_src_p * f_in_p * 2 <= 8 * 1024 * 1024)

    # ---- padded / cast inputs (bf16 BEFORE padding: half the prologue bytes) ----
    adj_p = jnp.pad(adj.astype(jnp.bfloat16),
                    ((0, n_dst_p - n_dst), (0, n_src_p - n_src)))
    x_src_p = jnp.pad(x_src.astype(jnp.bfloat16),
                      ((0, n_src_p - n_src), (0, f_in_p - f_in)))
    x_src_p = x_src_p.at[:n_src, f_in].set(1.0)      # degree-accumulator column
    x_dst_p = jnp.pad(x_dst.astype(jnp.bfloat16),
                      ((0, n_dst_p - n_dst), (0, f_in_p - f_in)))

    # Fused projection weights: [W_self ; W_neigh] stacked on the K axis, bf16.
    w_cat = jnp.zeros((2 * f_in_p, f_out_p), jnp.float32)
    w_cat = w_cat.at[:f_in, :f_out].set(w_self.astype(jnp.float32))
    w_cat = w_cat.at[f_in_p:f_in_p + f_in, :f_out].set(w_neigh.astype(jnp.float32))
    w_cat = w_cat.astype(jnp.bfloat16)
    bias_p = jnp.pad(bias.astype(jnp.float32).reshape(1, -1),
                     ((0, 0), (0, f_out_p - f_out)))

    if src_resident:
        x_src_spec = pl.BlockSpec((n_src_p, f_in_p), lambda i, k: (0, 0))
    else:
        x_src_spec = pl.BlockSpec((tk, f_in_p), lambda i, k: (k, 0))

    kernel = functools.partial(_sage_kernel, src_resident=src_resident,
                               deg_col=f_in_p + f_in)

    out_p = pl.pallas_call(
        kernel,
        out_shape=jax.ShapeDtypeStruct((n_dst_p, f_out_p), jnp.float32),
        grid_spec=pltpu.PrefetchScalarGridSpec(
            num_scalar_prefetch=0,
            grid=(n_i, n_k),
            in_specs=[
                pl.BlockSpec((tm, tk), lambda i, k: (i, k)),               # adj  (bf16)
                x_src_spec,                                                # x_src (bf16)
                pl.BlockSpec((tm, f_in_p), lambda i, k: (i, 0)),           # x_dst (bf16)
                pl.BlockSpec((2 * f_in_p, f_out_p), lambda i, k: (0, 0)),  # w_cat (bf16)
                pl.BlockSpec((1, f_out_p), lambda i, k: (0, 0)),           # bias  (f32)
            ],
            out_specs=pl.BlockSpec((tm, f_out_p), lambda i, k: (i, 0)),
            scratch_shapes=[pltpu.VMEM((tm, 2 * f_in_p), jnp.float32)],
        ),
        compiler_params=pltpu.CompilerParams(
            dimension_semantics=("parallel", "arbitrary"),
            vmem_limit_bytes=48 * 1024 * 1024,  # headroom on v7x (64 MiB), ample on v5e/v6e
        ),
    )(adj_p, x_src_p, x_dst_p, w_cat, bias_p)

    return out_p[:n_dst, :f_out]


class GCN:
    """Mirror of the PyTorch GCN module: one hetero SAGEConv('mean', ReLU) on edge type 'ui'."""

    def __init__(self, in_feat, out_feat, key):
        k1, k2, k3 = jax.random.split(key, 3)
        scale = 1.0 / jnp.sqrt(jnp.float32(in_feat))
        # Deterministic synthetic init (Xavier-ish uniform), stored pre-transposed.
        self.w_self = jax.random.uniform(k1, (in_feat, out_feat), jnp.float32, -scale, scale)
        self.w_neigh = jax.random.uniform(k2, (in_feat, out_feat), jnp.float32, -scale, scale)
        self.bias = jax.random.uniform(k3, (1, out_feat), jnp.float32, -scale, scale)

    def forward(self, blocks, feats):
        """blocks: list whose first element is the dense adjacency
        [num_dst('i'), num_src('u')]; feats: dict {'u': [Ns, Fin], 'i': [Nd, Fin]}.
        Returns dict {'i': [Nd, Fout]} like HeteroGraphConv does."""
        block = blocks[0] if isinstance(blocks, (list, tuple)) else blocks
        out_i = sage_conv_mean(
            block, feats["u"], feats["i"], self.w_self, self.w_neigh, self.bias
        )
        return {"i": out_i}


if __name__ == "__main__":
    key = jax.random.PRNGKey(0)
    k_adj, k_u, k_i, k_params = jax.random.split(key, 4)

    num_src = 16   # 'u' nodes
    num_dst = 8    # 'i' nodes (destination nodes of the block)
    in_feat = 32
    out_feat = 32

    # Random bipartite block graph 'u' -> 'i' (edge type 'ui').
    adj = jax.random.bernoulli(k_adj, p=0.3, shape=(num_dst, num_src)).astype(jnp.float32)
    feats = {
        "u": jax.random.normal(k_u, (num_src, in_feat), jnp.float32),
        "i": jax.random.normal(k_i, (num_dst, in_feat), jnp.float32),
    }

    model = GCN(in_feat, out_feat, k_params)
    out = model.forward([adj], feats)
    jax.block_until_ready(out["i"])
    assert out["i"].shape == (num_dst, out_feat)

    # Pure-JAX reference mirroring the kernel's numerics:
    # bf16 adjacency / features / projection weights, f32 accumulation,
    # degree normalization and bias in f32.
    hi = jax.lax.Precision.HIGHEST
    adj_b = adj.astype(jnp.bfloat16).astype(jnp.float32)
    xs_b = feats["u"].astype(jnp.bfloat16).astype(jnp.float32)
    xd_b = feats["i"].astype(jnp.bfloat16).astype(jnp.float32)
    deg = adj.sum(-1, keepdims=True)
    inv_deg = jnp.where(deg > 0, 1.0 / deg, 0.0)
    h_neigh = jnp.dot(adj_b, xs_b, precision=hi) * inv_deg
    x_cat = jnp.concatenate([xd_b, h_neigh], axis=-1).astype(jnp.bfloat16).astype(jnp.float32)
    w_cat = jnp.concatenate([model.w_self, model.w_neigh], axis=0
                            ).astype(jnp.bfloat16).astype(jnp.float32)
    ref = jnp.maximum(jnp.dot(x_cat, w_cat, precision=hi) + model.bias, 0.0)

    assert jnp.allclose(out["i"], ref, atol=2e-3, rtol=2e-3), float(
        jnp.max(jnp.abs(out["i"] - ref))
    )

    print("KERNEL_OK")
</pallas_src>

<mosaic_0001>
module attributes {stable_mosaic.version = 11 : i64} {
  func.func @_sage_kernel(%arg0: i32, %arg1: i32, %arg2: memref<8x128xbf16, #tpu.memory_space<vmem>>, %arg3: memref<128x128xbf16, #tpu.memory_space<vmem>>, %arg4: memref<8x128xbf16, #tpu.memory_space<vmem>>, %arg5: memref<256x128xbf16, #tpu.memory_space<vmem>>, %arg6: memref<1x128xf32, #tpu.memory_space<vmem>>, %arg7: memref<8x128xf32, #tpu.memory_space<vmem>>, %arg8: memref<8x256xf32, #tpu.memory_space<vmem>>) attributes {dimension_semantics = [#tpu.dimension_semantics<parallel>, #tpu.dimension_semantics<arbitrary>], iteration_bounds = array<i64: 1, 1>, scalar_prefetch = 0 : i64, scratch_operands = 1 : i64, tpu.core_type = #tpu.core_type<tc>, window_params = [{transform_indices = @transform_0, window_bounds = array<i64: 8, 128>}, {transform_indices = @transform_1, window_bounds = array<i64: 128, 128>}, {transform_indices = @transform_2, window_bounds = array<i64: 8, 128>}, {pipeline_mode = #tpu.pipeline_mode<synchronous>, transform_indices = @transform_3, window_bounds = array<i64: 256, 128>}, {pipeline_mode = #tpu.pipeline_mode<synchronous>, transform_indices = @transform_4, window_bounds = array<i64: 1, 128>}, {transform_indices = @transform_5, window_bounds = array<i64: 8, 128>}]} {
    %c0_i32 = arith.constant 0 : i32
    %0 = arith.cmpi eq, %arg1, %c0_i32 : i32
    %1 = arith.extui %0 : i1 to i32
    %c0_i32_0 = arith.constant 0 : i32
    %2 = arith.cmpi ne, %1, %c0_i32_0 : i32
    scf.if %2 {
      %c0_9 = arith.constant 0 : index
      %c0_10 = arith.constant 0 : index
      %12 = vector.load %arg4[%c0_9, %c0_10] : memref<8x128xbf16, #tpu.memory_space<vmem>>, vector<8x128xbf16>
      %13 = arith.extf %12 : vector<8x128xbf16> to vector<8x128xf32>
      %c0_11 = arith.constant 0 : index
      %c0_12 = arith.constant 0 : index
      %14 = vector.load %arg8[%c0_11, %c0_12] : memref<8x256xf32, #tpu.memory_space<vmem>>, vector<8x128xf32>
      tpu.vector_store %arg8[%c0_11, %c0_12], %13 {strides = array<i32>} : memref<8x256xf32, #tpu.memory_space<vmem>>, vector<8x128xf32>,
      %cst_13 = arith.constant 0.000000e+00 : f32
      %15 = vector.broadcast %cst_13 : f32 to vector<8x128xf32>
      %c0_14 = arith.constant 0 : index
      %c128_15 = arith.constant 128 : index
      %16 = vector.load %arg8[%c0_14, %c128_15] : memref<8x256xf32, #tpu.memory_space<vmem>>, vector<8x128xf32>
      tpu.vector_store %arg8[%c0_14, %c128_15], %15 {strides = array<i32>} : memref<8x256xf32, #tpu.memory_space<vmem>>, vector<8x128xf32>,
    } else {
    }
    %c0 = arith.constant 0 : index
    %c0_1 = arith.constant 0 : index
    %3 = vector.load %arg2[%c0, %c0_1] : memref<8x128xbf16, #tpu.memory_space<vmem>>, vector<8x128xbf16>
    %c0_2 = arith.constant 0 : index
    %c0_3 = arith.constant 0 : index
    %4 = vector.load %arg3[%c0_2, %c0_3] : memref<128x128xbf16, #tpu.memory_space<vmem>>, vector<128x128xbf16>
    %c0_4 = arith.constant 0 : index
    %c128 = arith.constant 128 : index
    %5 = vector.load %arg8[%c0_4, %c128] : memref<8x256xf32, #tpu.memory_space<vmem>>, vector<8x128xf32>
    %cst = arith.constant dense<0.000000e+00> : vector<8x128xf32>
    %6 = tpu.matmul %3, %4, %cst {dimension_numbers = #tpu.dot_dimension_numbers<[1], [0], [0], [1], [0, 0, 1, 1], [], []>} : vector<8x128xbf16>, vector<128x128xbf16>, vector<8x128xf32> -> vector<8x128xf32>
    %7 = arith.addf %5, %6 : vector<8x128xf32>
    %c0_5 = arith.constant 0 : index
    %c128_6 = arith.constant 128 : index
    %8 = vector.load %arg8[%c0_5, %c128_6] : memref<8x256xf32, #tpu.memory_space<vmem>>, vector<8x128xf32>
    tpu.vector_store %arg8[%c0_5, %c128_6], %7 {strides = array<i32>} : memref<8x256xf32, #tpu.memory_space<vmem>>, vector<8x128xf32>,
    %c0_i32_7 = arith.constant 0 : i32
    %9 = arith.cmpi eq, %arg1, %c0_i32_7 : i32
    %10 = arith.extui %9 : i1 to i32
    %c0_i32_8 = arith.constant 0 : i32
    %11 = arith.cmpi ne, %10, %c0_i32_8 : i32
    scf.if %11 {
      %c0_9 = arith.constant 0 : index
      %c160 = arith.constant 160 : index
      %12 = vector.load %arg8[%c0_9, %c160] : memref<8x256xf32, #tpu.memory_space<vmem>>, vector<8x1xf32>
      %cst_10 = arith.constant 0.000000e+00 : f32
      %13 = vector.broadcast %cst_10 : f32 to vector<8x1xf32>
      %14 = arith.cmpf ogt, %12, %13 : vector<8x1xf32>
      %cst_11 = arith.constant 1.000000e+00 : f32
      %15 = vector.broadcast %cst_11 : f32 to vector<8x1xf32>
      %16 = arith.divf %15, %12 : vector<8x1xf32>
      %cst_12 = arith.constant 0.000000e+00 : f32
      %17 = vector.broadcast %cst_12 : f32 to vector<8x1xf32>
      %18 = arith.select %14, %16, %17 : vector<8x1xi1>, vector<8x1xf32>
      %c0_13 = arith.constant 0 : index
      %c128_14 = arith.constant 128 : index
      %19 = vector.load %arg8[%c0_13, %c128_14] : memref<8x256xf32, #tpu.memory_space<vmem>>, vector<8x128xf32>
      %20 = vector.broadcast %18 : vector<8x1xf32> to vector<8x128xf32>
      %21 = arith.mulf %19, %20 : vector<8x128xf32>
      %c0_15 = arith.constant 0 : index
      %c128_16 = arith.constant 128 : index
      %22 = vector.load %arg8[%c0_15, %c128_16] : memref<8x256xf32, #tpu.memory_space<vmem>>, vector<8x128xf32>
      tpu.vector_store %arg8[%c0_15, %c128_16], %21 {strides = array<i32>} : memref<8x256xf32, #tpu.memory_space<vmem>>, vector<8x128xf32>,
      %c0_17 = arith.constant 0 : index
      %c0_18 = arith.constant 0 : index
      %23 = vector.load %arg8[%c0_17, %c0_18] : memref<8x256xf32, #tpu.memory_space<vmem>>, vector<8x256xf32>
      %24 = arith.truncf %23 : vector<8x256xf32> to vector<8x256xbf16>
      %c0_19 = arith.constant 0 : index
      %c0_20 = arith.constant 0 : index
      %25 = vector.load %arg5[%c0_19, %c0_20] : memref<256x128xbf16, #tpu.memory_space<vmem>>, vector<256x128xbf16>
      %cst_21 = arith.constant dense<0.000000e+00> : vector<8x128xf32>
      %26 = tpu.matmul %24, %25, %cst_21 {dimension_numbers = #tpu.dot_dimension_numbers<[1], [0], [0], [1], [0, 0, 1, 1], [], []>} : vector<8x256xbf16>, vector<256x128xbf16>, vector<8x128xf32> -> vector<8x128xf32>
      %c0_22 = arith.constant 0 : index
      %c0_23 = arith.constant 0 : index
      %27 = vector.load %arg6[%c0_22, %c0_23] : memref<1x128xf32, #tpu.memory_space<vmem>>, vector<1x128xf32>
      %28 = vector.broadcast %27 : vector<1x128xf32> to vector<8x128xf32>
      %29 = arith.addf %26, %28 : vector<8x128xf32>
      %cst_24 = arith.constant 0.000000e+00 : f32
      %30 = vector.broadcast %cst_24 : f32 to vector<8x128xf32>
      %31 = arith.maximumf %29, %30 : vector<8x128xf32>
      %c0_25 = arith.constant 0 : index
      %c0_26 = arith.constant 0 : index
      %32 = vector.load %arg7[%c0_25, %c0_26] : memref<8x128xf32, #tpu.memory_space<vmem>>, vector<8x128xf32>
      tpu.vector_store %arg7[%c0_25, %c0_26], %31 {strides = array<i32>} : memref<8x128xf32, #tpu.memory_space<vmem>>, vector<8x128xf32>,
    } else {
    }
    return
  }
  func.func @transform_0(%arg0: i32, %arg1: i32) -> (i32, i32) {
    %c0_i32 = arith.constant 0 : i32
    return %arg0, %arg1 : i32, i32
  }
  func.func @transform_1(%arg0: i32, %arg1: i32) -> (i32, i32) {
    %c0_i32 = arith.constant 0 : i32
    %c0_i32_0 = arith.constant 0 : i32
    return %arg1, %c0_i32 : i32, i32
  }
  func.func @transform_2(%arg0: i32, %arg1: i32) -> (i32, i32) {
    %c0_i32 = arith.constant 0 : i32
    %c0_i32_0 = arith.constant 0 : i32
    return %arg0, %c0_i32 : i32, i32
  }
  func.func @transform_3(%arg0: i32, %arg1: i32) -> (i32, i32) {
    %c0_i32 = arith.constant 0 : i32
    %c0_i32_0 = arith.constant 0 : i32
    %c0_i32_1 = arith.constant 0 : i32
    return %c0_i32, %c0_i32_0 : i32, i32
  }
  func.func @transform_4(%arg0: i32, %arg1: i32) -> (i32, i32) {
    %c0_i32 = arith.constant 0 : i32
    %c0_i32_0 = arith.constant 0 : i32
    %c0_i32_1 = arith.constant 0 : i32
    return %c0_i32, %c0_i32_0 : i32, i32
  }
  func.func @transform_5(%arg0: i32, %arg1: i32) -> (i32, i32) {
    %c0_i32 = arith.constant 0 : i32
    %c0_i32_0 = arith.constant 0 : i32
    return %arg0, %c0_i32 : i32, i32
  }
}

</mosaic_0001>

<llo_original>
// kernel: tpu_custom_call.1
$region0: #{tpu_custom_call.1}
  #allocation0 [shape = 'u32[]', space=smem, size = 0x4, offset = 0x4, fixed_abs, tag = 'smem constant byte address 0x4 - core index']
  #allocation1 [shape = 'u32[144,128]{1,0:T(1,128)}', space=vmem, size = 0x12000, scoped, tag = 'internal scratch']
  #allocation2 [shape = 'f32[8,256]{1,0:T(8,128)}', space=vmem, size = 0x2000, scoped, tag = 'scratch operand']
  %s0 = inlined_call_operand.hbm [shape: bf16[8,128], index: 0, kind: input, shape index: {}]
  %s1 = inlined_call_operand.hbm [shape: bf16[128,128], index: 1, kind: input, shape index: {}]
  %s2 = inlined_call_operand.hbm [shape: bf16[8,128], index: 2, kind: input, shape index: {}]
  %s3 = inlined_call_operand.hbm [shape: bf16[256,128], index: 3, kind: input, shape index: {}]
  %s4 = inlined_call_operand.vmem [shape: f32[1,128], index: 4, kind: input, shape index: {}]
  %s5 = inlined_call_operand.hbm [shape: f32[8,128], index: 5, kind: output, shape index: {}]
  %s6 = sld [smem:[#allocation0]]
  $region54: #{tpu_custom_call.1} parent=0
    _
  %s8 = ssub.s32 1, %s6
  %s9 = scalar_select 0, %s8, %s6
  $region1: #{tpu_custom_call.1} parent=0
    #allocation3 [shape = 'u8[2048]{0}', space=vmem, size = 0x800, scoped, tag = 'input window, operand 0, single buffered']
    #allocation4 [shape = 's32[1]{0}', space=sflag, size = 0x4, scoped, tag = 'scoped memory for tpu_custom_call.1']
    #allocation5 [shape = 's32[1]{0}', space=sflag, size = 0x4, scoped, tag = 'scoped memory for tpu_custom_call.1']
    #allocation6 [shape = 'u8[32768]{0}', space=vmem, size = 0x8000, scoped, tag = 'input window, operand 1, single buffered']
    #allocation7 [shape = 's32[1]{0}', space=sflag, size = 0x4, scoped, tag = 'scoped memory for tpu_custom_call.1']
    #allocation8 [shape = 'u8[2048]{0}', space=vmem, size = 0x800, scoped, tag = 'input window, operand 2, single buffered']
    #allocation9 [shape = 'u8[65536]{0}', space=vmem, size = 0x10000, scoped, tag = 'input window, operand 3, single buffered']
    #allocation10 [shape = 's32[1]{0}', space=sflag, size = 0x4, scoped, tag = 'scoped memory for tpu_custom_call.1']
    #allocation11 [shape = 'u8[4096]{0}', space=vmem, size = 0x1000, scoped, tag = 'output window, operand 0, single buffered']
    %10 = vsyncpa [#allocation4], 0
    %11 = vsyncpa [#allocation7], 0
    %12 = vsyncpa [#allocation10], 0
    %13 = vsyncpa [#allocation5], 0
    // Predicated region
    $region2: #{tpu_custom_call.1} parent=1 // pred_check
      _
    $region3: #{tpu_custom_call.1} parent=1 // pred_check_branch
      %15 = sbr.rel (0) target = $region5
    $region4: #{tpu_custom_call.1} parent=1 // pred_region
      %s17 = ssub.s32 64, 64
      %18 = vsyncadd [#allocation4], %s17
      %s20 = sshll.u32 [#allocation3], 4
      %s21 = int_to_ptr.vmem [resolvable:$true] %s20
      %23 = dma.hbm_to_vmem [thread:$0]  %s0, 64, %s21, [#allocation4]
    $region5: #{tpu_custom_call.1} parent=1 // pred_fallthru
      _
    // Predicated region
    $region6: #{tpu_custom_call.1} parent=1 // pred_check
      _
    $region7: #{tpu_custom_call.1} parent=1 // pred_check_branch
      %25 = sbr.rel (0) target = $region9
    $region8: #{tpu_custom_call.1} parent=1 // pred_region
      %s27 = ssub.s32 1024, 1024
      %28 = vsyncadd [#allocation7], %s27
      %s29 = sshll.u32 [#allocation6], 4
      %s30 = int_to_ptr.vmem [resolvable:$true] %s29
      %35 = dma.hbm_to_vmem [thread:$0]  %s1, 1024, %s30, [#allocation7], 64, 64, 4
    $region9: #{tpu_custom_call.1} parent=1 // pred_fallthru
      _
    // Predicated region
    $region10: #{tpu_custom_call.1} parent=1 // pred_check
      _
    $region11: #{tpu_custom_call.1} parent=1 // pred_check_branch
      %37 = sbr.rel (0) target = $region13
    $region12: #{tpu_custom_call.1} parent=1 // pred_region
      %s39 = ssub.s32 64, 64
      %40 = vsyncadd [#allocation7], %s39
      %s42 = sshll.u32 [#allocation8], 4
      %s43 = int_to_ptr.vmem [resolvable:$true] %s42
      %45 = dma.hbm_to_vmem [thread:$0]  %s2, 64, %s43, [#allocation7]
    $region13: #{tpu_custom_call.1} parent=1 // pred_fallthru
      _
    // Predicated region
    $region14: #{tpu_custom_call.1} parent=1 // pred_check
      _
    $region15: #{tpu_custom_call.1} parent=1 // pred_check_branch
      %47 = sbr.rel (0) target = $region17
    $region16: #{tpu_custom_call.1} parent=1 // pred_region
      %s49 = ssub.s32 2048, 2048
      %50 = vsyncadd [#allocation10], %s49
      %s51 = sshll.u32 [#allocation9], 4
      %s52 = int_to_ptr.vmem [resolvable:$true] %s51
      %57 = dma.hbm_to_vmem [thread:$0]  %s3, 2048, %s52, [#allocation10], 64, 64, 4
    $region17: #{tpu_custom_call.1} parent=1 // pred_fallthru
      _
    // Predicated region
    $region18: #{tpu_custom_call.1} parent=1 // pred_check
      _
    $region19: #{tpu_custom_call.1} parent=1 // pred_check_branch
      %59 = sbr.rel (0) target = $region21
    $region20: #{tpu_custom_call.1} parent=1 // pred_region
      _
    $region21: #{tpu_custom_call.1} parent=1 // pred_fallthru
      _
    // Predicated region
    $region22: #{tpu_custom_call.1} parent=1 // pred_check
      _
    $region23: #{tpu_custom_call.1} parent=1 // pred_check_branch
      %61 = sbr.rel (0) target = $region25
    $region24: #{tpu_custom_call.1} parent=1 // pred_region
      %62 = dma.done [#allocation4], 64
    $region25: #{tpu_custom_call.1} parent=1 // pred_fallthru
      _
    // Predicated region
    $region26: #{tpu_custom_call.1} parent=1 // pred_check
      _
    $region27: #{tpu_custom_call.1} parent=1 // pred_check_branch
      %64 = sbr.rel (0) target = $region29
    $region28: #{tpu_custom_call.1} parent=1 // pred_region
      %65 = dma.done [#allocation7], 1024
    $region29: #{tpu_custom_call.1} parent=1 // pred_fallthru
      _
    // Predicated region
    $region30: #{tpu_custom_call.1} parent=1 // pred_check
      _
    $region31: #{tpu_custom_call.1} parent=1 // pred_check_branch
      %67 = sbr.rel (0) target = $region33
    $region32: #{tpu_custom_call.1} parent=1 // pred_region
      %68 = dma.done [#allocation7], 64
    $region33: #{tpu_custom_call.1} parent=1 // pred_fallthru
      _
    // Predicated region
    $region34: #{tpu_custom_call.1} parent=1 // pred_check
      _
    $region35: #{tpu_custom_call.1} parent=1 // pred_check_branch
      %70 = sbr.rel (0) target = $region37
    $region36: #{tpu_custom_call.1} parent=1 // pred_region
      %71 = dma.done [#allocation10], 2048
    $region37: #{tpu_custom_call.1} parent=1 // pred_fallthru
      _
    %p73 = scmp.eq.s32.totalorder 0, 0
    // Predicated region
    $region38: #{tpu_custom_call.1} parent=1 // pred_check
      %p74 = pneg %p73
    $region39: #{tpu_custom_call.1} parent=1 // pred_check_branch
      %76 = sbr.rel (%p74) target = $region41
    $region40: #{tpu_custom_call.1} parent=1 // pred_region
      %v77 = vld [vmem:[#allocation8] sm:$0xf]
      %v78 = vunpack.c.l.bf16 %v77
      %79 = vst [vmem:[#allocation2] sm:$0xff] %v78
      %80 = vst [vmem:[#allocation2 + $0x8] sm:$0xff] 0.0
    $region41: #{tpu_custom_call.1} parent=1 // pred_fallthru
      _
    %v81 = vld [vmem:[#allocation3] sm:$0xf]
    %v82 = vld [vmem:[#allocation6] sm:$0xf]
    %v83 = vld [vmem:[#allocation6 + $0x4] sm:$0xf]
    %v84 = vld [vmem:[#allocation6 + $0x8] sm:$0xf]
    %v85 = vld [vmem:[#allocation6 + $0xc] sm:$0xf]
    %v86 = vld [vmem:[#allocation6 + $0x10] sm:$0xf]
    %v87 = vld [vmem:[#allocation6 + $0x14] sm:$0xf]
    %v88 = vld [vmem:[#allocation6 + $0x18] sm:$0xf]
    %v89 = vld [vmem:[#allocation6 + $0x1c] sm:$0xf]
    %v90 = vld [vmem:[#allocation6 + $0x20] sm:$0xf]
    %v91 = vld [vmem:[#allocation6 + $0x24] sm:$0xf]
    %v92 = vld [vmem:[#allocation6 + $0x28] sm:$0xf]
    %v93 = vld [vmem:[#allocation6 + $0x2c] sm:$0xf]
    %v94 = vld [vmem:[#allocation6 + $0x30] sm:$0xf]
    %v95 = vld [vmem:[#allocation6 + $0x34] sm:$0xf]
    %v96 = vld [vmem:[#allocation6 + $0x38] sm:$0xf]
    %v97 = vld [vmem:[#allocation6 + $0x3c] sm:$0xf]
    %v98 = vld [vmem:[#allocation2 + $0x8] sm:$0xff]
    %v115 = vunpack.c.l.b16 %v82
    %v116 = vunpack.c.l.b16 %v83
    %v117 = vunpack.c.l.b16 %v84
    %v118 = vunpack.c.l.b16 %v85
    %v119 = vunpack.c.l.b16 %v86
    %v120 = vunpack.c.l.b16 %v87
    %v121 = vunpack.c.l.b16 %v88
    %v122 = vunpack.c.l.b16 %v89
    %v123 = vunpack.c.l.b16 %v90
    %v124 = vunpack.c.l.b16 %v91
    %v125 = vunpack.c.l.b16 %v92
    %v126 = vunpack.c.l.b16 %v93
    %v127 = vunpack.c.l.b16 %v94
    %v128 = vunpack.c.l.b16 %v95
    %v129 = vunpack.c.l.b16 %v96
    %v130 = vunpack.c.l.b16 %v97
    %v131 = vpack.c.b16 %v116, %v115
    %v132 = vpack.c.b16 %v118, %v117
    %v133 = vpack.c.b16 %v120, %v119
    %v134 = vpack.c.b16 %v122, %v121
    %v135 = vpack.c.b16 %v124, %v123
    %v136 = vpack.c.b16 %v126, %v125
    %v137 = vpack.c.b16 %v128, %v127
    %v138 = vpack.c.b16 %v130, %v129
    %147 = vmatprep.subr.bf16.mxu0 0
    %148 = vmatpush1.bf16.msra.mxu0 %v138
    %149 = vmatprep.subr.bf16.mxu0 0
    %150 = vmatpush1.bf16.msra.mxu0 %v137
    %151 = vmatprep.subr.bf16.mxu0 0
    %152 = vmatpush1.bf16.msra.mxu0 %v136
    %153 = vmatprep.subr.bf16.mxu0 0
    %154 = vmatpush1.bf16.msra.mxu0 %v135
    %155 = vmatprep.subr.bf16.mxu0 0
    %156 = vmatpush1.bf16.msra.mxu0 %v134
    %157 = vmatprep.subr.bf16.mxu0 0
    %158 = vmatpush1.bf16.msra.mxu0 %v133
    %159 = vmatprep.subr.bf16.mxu0 0
    %160 = vmatpush1.bf16.msra.mxu0 %v132
    %161 = vmatprep.subr.bf16.mxu0 0
    %162 = vmatpush1.bf16.msra.mxu0 %v131
    %163 = vmatprep.subr.bf16.mxu0 0
    %164 = vmatpush2.bf16.msra.mxu0 0
    %165 = vmatprep.subr.bf16.mxu0 0
    %166 = vmatpush2.bf16.msra.mxu0 0
    %167 = vmatprep.subr.bf16.mxu0 0
    %168 = vmatpush2.bf16.msra.mxu0 0
    %169 = vmatprep.subr.bf16.mxu0 0
    %170 = vmatpush2.bf16.msra.mxu0 0
    %171 = vmatprep.subr.bf16.mxu0 0
    %172 = vmatpush2.bf16.msra.mxu0 0
    %173 = vmatprep.subr.bf16.mxu0 0
    %174 = vmatpush2.bf16.msra.mxu0 0
    %175 = vmatprep.subr.bf16.mxu0 0
    %176 = vmatpush2.bf16.msra.mxu0 0
    %177 = vmatprep.subr.bf16.mxu0 0
    %178 = vmatpush2.bf16.msra.mxu0 0
    %179 = vmatprep.mubr.bf16.mxu0 0
    %180 = vmatmul.mubr.bf16.gmra.mxu0 %v81
    %v181 = vpop.f32.mrf.mxu0
    %v182 = vadd.f32 0.0, %v181
    %v183 = vpop.f32.mrf.mxu0
    %v184 = vpop.f32.mrf.mxu0
    %v185 = vpop.f32.mrf.mxu0
    %186 = vdwg.mxu0
    %v187 = vadd.f32 %v98, %v182
    %188 = vst [vmem:[#allocation2 + $0x8] sm:$0xff] %v187
    // Predicated region
    $region42: #{tpu_custom_call.1} parent=1 // pred_check
      %p189 = pneg %p73
    $region43: #{tpu_custom_call.1} parent=1 // pred_check_branch
      %191 = sbr.rel (%p189) target = $region45
    $region44: #{tpu_custom_call.1} parent=1 // pred_region
      %v192 = vld [vmem:[#allocation2 + $0x8] sm:$0xff]
      %vm193 = vcmp.gt.f32.partialorder %v192, 0.0
      %v194 = vrcp.pop %v192
      %v195 = vmul.f32 1.0, %v194
      %v196 = vsel %vm193, %v195, 0.0
      %198 = vset.pattern.permute.xlu0 32
      %199 = vperm.xlu0 %198, %v196
      %v200 = vpop.permute.xlu0 %199
      %v202 = vmul.f32 %v192, %v200
      %203 = vst [vmem:[#allocation2 + $0x8] sm:$0xff] %v202
      %v204 = vld [vmem:[#allocation2] sm:$0xff]
      %v205 = vld [vmem:[#allocation2 + $0x8] sm:$0xff]
      %v206 = vpack.c.bf16 %v204, %v204
      %v207 = vpack.c.bf16 %v205, %v205
      %v208 = vld [vmem:[#allocation9] sm:$0xf]
      %v209 = vld [vmem:[#allocation9 + $0x4] sm:$0xf]
      %v210 = vld [vmem:[#allocation9 + $0x8] sm:$0xf]
      %v211 = vld [vmem:[#allocation9 + $0xc] sm:$0xf]
      %v212 = vld [vmem:[#allocation9 + $0x10] sm:$0xf]
      %v213 = vld [vmem:[#allocation9 + $0x14] sm:$0xf]
      %v214 = vld [vmem:[#allocation9 + $0x18] sm:$0xf]
      %v215 = vld [vmem:[#allocation9 + $0x1c] sm:$0xf]
      %v216 = vld [vmem:[#allocation9 + $0x20] sm:$0xf]
      %v217 = vld [vmem:[#allocation9 + $0x24] sm:$0xf]
      %v218 = vld [vmem:[#allocation9 + $0x28] sm:$0xf]
      %v219 = vld [vmem:[#allocation9 + $0x2c] sm:$0xf]
      %v220 = vld [vmem:[#allocation9 + $0x30] sm:$0xf]
      %v221 = vld [vmem:[#allocation9 + $0x34] sm:$0xf]
      %v222 = vld [vmem:[#allocation9 + $0x38] sm:$0xf]
      %v223 = vld [vmem:[#allocation9 + $0x3c] sm:$0xf]
      %v224 = vld [vmem:[#allocation9 + $0x40] sm:$0xf]
      %v225 = vld [vmem:[#allocation9 + $0x44] sm:$0xf]
      %v226 = vld [vmem:[#allocation9 + $0x48] sm:$0xf]
      %v227 = vld [vmem:[#allocation9 + $0x4c] sm:$0xf]
      %v228 = vld [vmem:[#allocation9 + $0x50] sm:$0xf]
      %v229 = vld [vmem:[#allocation9 + $0x54] sm:$0xf]
      %v230 = vld [vmem:[#allocation9 + $0x58] sm:$0xf]
      %v231 = vld [vmem:[#allocation9 + $0x5c] sm:$0xf]
      %v232 = vld [vmem:[#allocation9 + $0x60] sm:$0xf]
      %v233 = vld [vmem:[#allocation9 + $0x64] sm:$0xf]
      %v234 = vld [vmem:[#allocation9 + $0x68] sm:$0xf]
      %v235 = vld [vmem:[#allocation9 + $0x6c] sm:$0xf]
      %v236 = vld [vmem:[#allocation9 + $0x70] sm:$0xf]
      %v237 = vld [vmem:[#allocation9 + $0x74] sm:$0xf]
      %v238 = vld [vmem:[#allocation9 + $0x78] sm:$0xf]
      %v239 = vld [vmem:[#allocation9 + $0x7c] sm:$0xf]
      %v240 = vld [vmem:[%s4] sm:$0x1]
      %v242 = vlaneseq
      %v243 = vshrl.u32 %v242, 7
      %v244 = vsub.s32 0, %v243
      %v245 = vrot.slane %v240, %v244
      %v279 = vunpack.c.l.b16 %v208
      %v280 = vunpack.c.l.b16 %v209
      %v281 = vunpack.c.l.b16 %v210
      %v282 = vunpack.c.l.b16 %v211
      %v283 = vunpack.c.l.b16 %v212
      %v284 = vunpack.c.l.b16 %v213
      %v285 = vunpack.c.l.b16 %v214
      %v286 = vunpack.c.l.b16 %v215
      %v287 = vunpack.c.l.b16 %v216
      %v288 = vunpack.c.l.b16 %v217
      %v289 = vunpack.c.l.b16 %v218
      %v290 = vunpack.c.l.b16 %v219
      %v291 = vunpack.c.l.b16 %v220
      %v292 = vunpack.c.l.b16 %v221
      %v293 = vunpack.c.l.b16 %v222
      %v294 = vunpack.c.l.b16 %v223
      %v295 = vunpack.c.l.b16 %v224
      %v296 = vunpack.c.l.b16 %v225
      %v297 = vunpack.c.l.b16 %v226
      %v298 = vunpack.c.l.b16 %v227
      %v299 = vunpack.c.l.b16 %v228
      %v300 = vunpack.c.l.b16 %v229
      %v301 = vunpack.c.l.b16 %v230
      %v302 = vunpack.c.l.b16 %v231
      %v303 = vunpack.c.l.b16 %v232
      %v304 = vunpack.c.l.b16 %v233
      %v305 = vunpack.c.l.b16 %v234
      %v306 = vunpack.c.l.b16 %v235
      %v307 = vunpack.c.l.b16 %v236
      %v308 = vunpack.c.l.b16 %v237
      %v309 = vunpack.c.l.b16 %v238
      %v310 = vunpack.c.l.b16 %v239
      %v311 = vpack.c.b16 %v280, %v279
      %v312 = vpack.c.b16 %v282, %v281
      %v313 = vpack.c.b16 %v284, %v283
      %v314 = vpack.c.b16 %v286, %v285
      %v315 = vpack.c.b16 %v288, %v287
      %v316 = vpack.c.b16 %v290, %v289
      %v317 = vpack.c.b16 %v292, %v291
      %v318 = vpack.c.b16 %v294, %v293
      %v319 = vpack.c.b16 %v296, %v295
      %v320 = vpack.c.b16 %v298, %v297
      %v321 = vpack.c.b16 %v300, %v299
      %v322 = vpack.c.b16 %v302, %v301
      %v323 = vpack.c.b16 %v304, %v303
      %v324 = vpack.c.b16 %v306, %v305
      %v325 = vpack.c.b16 %v308, %v307
      %v326 = vpack.c.b16 %v310, %v309
      %343 = vmatprep.subr.bf16.mxu0 0
      %344 = vmatpush1.bf16.msra.mxu0 %v318
      %345 = vmatprep.subr.bf16.mxu0 0
      %346 = vmatpush1.bf16.msra.mxu0 %v317
      %347 = vmatprep.subr.bf16.mxu0 0
      %348 = vmatpush1.bf16.msra.mxu0 %v316
      %349 = vmatprep.subr.bf16.mxu0 0
      %350 = vmatpush1.bf16.msra.mxu0 %v315
      %351 = vmatprep.subr.bf16.mxu0 0
      %352 = vmatpush1.bf16.msra.mxu0 %v314
      %353 = vmatprep.subr.bf16.mxu0 0
      %354 = vmatpush1.bf16.msra.mxu0 %v313
      %355 = vmatprep.subr.bf16.mxu0 0
      %356 = vmatpush1.bf16.msra.mxu0 %v312
      %357 = vmatprep.subr.bf16.mxu0 0
      %358 = vmatpush1.bf16.msra.mxu0 %v311
      %359 = vmatprep.subr.bf16.mxu0 0
      %360 = vmatpush2.bf16.msra.mxu0 %v326
      %361 = vmatprep.subr.bf16.mxu0 0
      %362 = vmatpush2.bf16.msra.mxu0 %v325
      %363 = vmatprep.subr.bf16.mxu0 0
      %364 = vmatpush2.bf16.msra.mxu0 %v324
      %365 = vmatprep.subr.bf16.mxu0 0
      %366 = vmatpush2.bf16.msra.mxu0 %v323
      %367 = vmatprep.subr.bf16.mxu0 0
      %368 = vmatpush2.bf16.msra.mxu0 %v322
      %369 = vmatprep.subr.bf16.mxu0 0
      %370 = vmatpush2.bf16.msra.mxu0 %v321
      %371 = vmatprep.subr.bf16.mxu0 0
      %372 = vmatpush2.bf16.msra.mxu0 %v320
      %373 = vmatprep.subr.bf16.mxu0 0
      %374 = vmatpush2.bf16.msra.mxu0 %v319
      %375 = vmatprep.mubr.bf16.mxu0 %v207
      %376 = vmatmul.mubr.bf16.gmra.mxu0 %v206
      %v377 = vpop.f32.mrf.mxu0
      %v378 = vadd.f32 %v245, %v377
      %v379 = vpop.f32.mrf.mxu0
      %v380 = vpop.f32.mrf.mxu0
      %v381 = vpop.f32.mrf.mxu0
      %382 = vdwg.mxu0
      %v383 = vmax.f32 %v378, 0.0
      %384 = vst [vmem:[#allocation11] sm:$0xff] %v383
    $region45: #{tpu_custom_call.1} parent=1 // pred_fallthru
      _
    // Predicated region
    $region46: #{tpu_custom_call.1} parent=1 // pred_check
      _
    $region47: #{tpu_custom_call.1} parent=1 // pred_check_branch
      %386 = sbr.rel (0) target = $region49
    $region48: #{tpu_custom_call.1} parent=1 // pred_region
      %s388 = ssub.s32 128, 128
      %389 = vsyncadd [#allocation5], %s388
      %s391 = sshll.u32 [#allocation11], 4
      %s392 = int_to_ptr.vmem [resolvable:$true] %s391
      %394 = dma.vmem_to_hbm [thread:$0]  %s392, 128, %s5, [#allocation5]
    $region49: #{tpu_custom_call.1} parent=1 // pred_fallthru
      _
    // Predicated region
    $region50: #{tpu_custom_call.1} parent=1 // pred_check
      _
    $region51: #{tpu_custom_call.1} parent=1 // pred_check_branch
      %396 = sbr.rel (0) target = $region53
    $region52: #{tpu_custom_call.1} parent=1 // pred_region
      %397 = dma.done [#allocation5], 128
    $region53: #{tpu_custom_call.1} parent=1 // pred_fallthru
      _
    %398 = vsyncpa [#allocation4], 1
    %399 = vsyncpa [#allocation7], 1
    %400 = vsyncpa [#allocation10], 1
    %401 = vsyncpa [#allocation5], 1

</llo_original>
